<compile_context>
chip_gen: v5e
topology: v5e:2x2
jax: 0.10.0
libtpu: 0.0.40
codegen_flags: <defaults>
</compile_context>

<pallas_src>
import math
import functools

import jax
import jax.numpy as jnp
from jax import lax
from jax.experimental import pallas as pl
from jax.experimental.pallas import tpu as pltpu

DROPOUT_P = 0.1
_KEEP_SCALE = 1.0 / (1.0 - DROPOUT_P)                       # python float (weak-typed)
# round(0.1 * 2**32): realized drop prob differs from 0.1 by ~1e-10.
_DROP_THRESHOLD = int(round(DROPOUT_P * float(2 ** 32)))    # python int (< 2**31)


def _make_pe(d_model: int, max_len: int) -> jnp.ndarray:
    """Deterministic sinusoidal positional-encoding table (max_len, d_model)."""
    position = jnp.arange(max_len, dtype=jnp.float32)[:, None]              # (L, 1)
    div_term = jnp.exp(jnp.arange(0, d_model, 2, dtype=jnp.float32)
                       * -(math.log(10000.0) / d_model))                    # (D/2,)
    angles = position * div_term                                            # (L, D/2)
    pe = jnp.zeros((max_len, d_model), dtype=jnp.float32)
    pe = pe.at[:, 0::2].set(jnp.sin(angles))
    pe = pe.at[:, 1::2].set(jnp.cos(angles))
    return pe


def _pe_dropout_kernel(training: bool, tb: int, tf: int, total_f: int,
                       seed_ref,   # scalar-prefetch: (1,) int32 in SMEM
                       x_ref,      # (tb, tf) VMEM tile of flattened x
                       pe_ref,     # (1, tf)  VMEM tile of flattened pe (batch-resident)
                       o_ref):     # (tb, tf) VMEM output tile
    # Compute in f32 so the 1/(1-p) keep-scale isn't applied post-bf16-rounding.
    y = x_ref[...].astype(jnp.float32) + pe_ref[...].astype(jnp.float32)

    if training:
        b_start = (pl.program_id(1) * tb).astype(jnp.uint32)
        f_start = (pl.program_id(0) * tf).astype(jnp.uint32)
        seed = seed_ref[0].astype(jnp.uint32)

        # Hoist the per-row term out of the per-element path: (tb,1) vector.
        row = lax.broadcasted_iota(jnp.uint32, (tb, 1), 0)
        col = lax.broadcasted_iota(jnp.uint32, (1, tf), 1)
        row_off = ((b_start + row) * jnp.uint32(total_f)
                   + f_start
                   + seed * jnp.uint32(0x9E3779B9))          # seed salt (scalar)
        gidx = row_off + col                                  # 1 add / element

        # Slim 2-round multiplicative mixer (good high-bit avalanche, ~half the
        # VALU ops of full murmur3 fmix32).  All constants built in-trace, no
        # captured device arrays.
        z = gidx * jnp.uint32(0x85EBCA6B)
        z = z ^ (z >> 15)
        z = z * jnp.uint32(0xC2B2AE35)
        z = z ^ (z >> 13)
        keep = z >= _DROP_THRESHOLD                           # P(drop) ~= 0.1
        y = jnp.where(keep, y * _KEEP_SCALE, 0.0)
        # TODO(synk): on real hardware, pltpu.prng_seed/prng_random_bits (seeded
        # per grid step) would move bit generation off the VALU slots entirely;
        # kept the counter hash for interpret-mode portability.

    o_ref[...] = y.astype(o_ref.dtype)


def _choose_tiles(B: int, F: int, itemsize: int, budget_bytes: int = 4 << 20):
    """Pick a lane-dense (tb, tf) block of ~budget_bytes.

    tf is a multiple of 128 (or the full F); tb is a multiple of 8 (or the full
    B).  The grid uses cdiv, so non-divisible shapes get a masked edge tile
    instead of an oversized block or a collapse to tiny blocks.
    """
    budget_elems = max(8 * 128, budget_bytes // itemsize)

    if F <= budget_elems:
        tf = F                                   # whole feature row in one tile
    else:
        tf = (budget_elems // 128) * 128         # lane-dense, <= budget

    rows = max(8, (budget_elems // tf // 8) * 8)  # row budget, multiple of 8
    if B <= 8:
        tb = B                                    # small batch: full dim (legal)
    elif B % 8 == 0 and B <= rows:
        tb = B                                    # whole batch fits in one block
    else:
        tb = min(rows, (B // 8) * 8)              # multiple of 8, <= B

    # Prefer an even total number of grid steps so v7x's 2 TensorCores split
    # the ("parallel","parallel") grid evenly.  Only nudge when it stays legal.
    gf, gb = pl.cdiv(F, tf), pl.cdiv(B, tb)
    steps = gf * gb
    if steps > 1 and steps % 2 == 1:
        if tb > 8 and tb % 16 == 0:
            tb //= 2
        elif tf > 128 and tf % 256 == 0:
            tf //= 2
    return tb, tf


def positional_encoding_forward(x: jnp.ndarray,
                                pe_table: jnp.ndarray,
                                seed: int = 0,
                                training: bool = True) -> jnp.ndarray:
    """x: (B, S, D). pe_table: (max_len, d_model). Returns (B, S, D) in x.dtype.

    Pass a different `seed` each training step for independent dropout masks.
    For zero PE-prep overhead, store pe_table already cast to x.dtype.
    """
    B, S, D = x.shape
    F = S * D

    # PE operand: fast path is just a slice of the row-major flattening (no
    # convert / per-step reshape work) when dtype and feature width match.
    if D == pe_table.shape[1] and pe_table.dtype == x.dtype:
        pe2 = pe_table.reshape(1, -1)[:, :F]
    else:
        pe2 = pe_table[:S, :D].astype(x.dtype).reshape(1, F)

    x2 = x.reshape(B, F)                         # lane-dense flattening
    tb, tf = _choose_tiles(B, F, x2.dtype.itemsize)
    grid = (pl.cdiv(F, tf), pl.cdiv(B, tb))      # batch is the inner (fast) axis

    seed_arr = jnp.asarray([seed], dtype=jnp.int32)
    kernel = functools.partial(_pe_dropout_kernel, training, tb, tf, F)

    grid_spec = pltpu.PrefetchScalarGridSpec(
        num_scalar_prefetch=1,
        grid=grid,
        in_specs=[
            pl.BlockSpec((tb, tf), lambda f, b, seed: (b, f)),   # x tile
            pl.BlockSpec((1, tf),  lambda f, b, seed: (0, f)),   # pe: resident across batch
        ],
        out_specs=pl.BlockSpec((tb, tf), lambda f, b, seed: (b, f)),
    )

    out2 = pl.pallas_call(
        kernel,
        out_shape=jax.ShapeDtypeStruct((B, F), x.dtype),
        grid_spec=grid_spec,
        compiler_params=pltpu.CompilerParams(
            # Every grid step writes a disjoint output block -> fully parallel.
            dimension_semantics=("parallel", "parallel"),
            # ~4 MiB blocks, double-buffered in/out + pe ~= 17 MiB: raise v5e's
            # 16 MiB scoped default; within v6e/v7x defaults (32 MiB).
            vmem_limit_bytes=32 * 1024 * 1024,
        ),
    )(seed_arr, x2, pe2)

    return out2.reshape(B, S, D)


if __name__ == "__main__":
    # Small shapes consistent with the module: batch=2, seq=8, d_model=32, max_len=16.
    B, S, D, MAX_LEN = 2, 8, 32, 16

    key = jax.random.PRNGKey(0)
    x = jax.random.normal(key, (B, S, D), dtype=jnp.float32)
    pe_table = _make_pe(d_model=D, max_len=MAX_LEN)

    out_train = jax.block_until_ready(
        positional_encoding_forward(x, pe_table, seed=0, training=True))
    out_eval = jax.block_until_ready(
        positional_encoding_forward(x, pe_table, training=False))

    assert out_train.shape == (B, S, D) and out_eval.shape == (B, S, D)

    # Eval path must be exactly x + pe (dropout is identity in eval mode).
    ref = x + pe_table[:S, :D][None]
    assert jnp.allclose(out_eval, ref, atol=1e-6)

    # Training path: every element is either 0 (dropped) or (x+pe)/(1-p) (kept & scaled).
    scaled = ref * _KEEP_SCALE
    ok = (jnp.isclose(out_train, 0.0, atol=1e-6)
          | jnp.isclose(out_train, scaled, atol=1e-5, rtol=1e-5))
    assert bool(jnp.all(ok))

    print("KERNEL_OK")
</pallas_src>

<mosaic_0001>
module attributes {stable_mosaic.version = 11 : i64} {
  func.func @_pe_dropout_kernel(%arg0: i32, %arg1: i32, %arg2: memref<1xi32, #tpu.memory_space<smem>>, %arg3: memref<2x256xf32, #tpu.memory_space<vmem>>, %arg4: memref<1x256xf32, #tpu.memory_space<vmem>>, %arg5: memref<2x256xf32, #tpu.memory_space<vmem>>) attributes {dimension_semantics = [#tpu.dimension_semantics<parallel>, #tpu.dimension_semantics<parallel>], iteration_bounds = array<i64: 1, 1>, scalar_prefetch = 1 : i64, scratch_operands = 0 : i64, tpu.core_type = #tpu.core_type<tc>, window_params = [{transform_indices = @transform_0, window_bounds = array<i64: 2, 256>}, {transform_indices = @transform_1, window_bounds = array<i64: 1, 256>}, {transform_indices = @transform_2, window_bounds = array<i64: 2, 256>}]} {
    %c0 = arith.constant 0 : index
    %c0_0 = arith.constant 0 : index
    %0 = vector.load %arg3[%c0, %c0_0] : memref<2x256xf32, #tpu.memory_space<vmem>>, vector<2x256xf32>
    %c0_1 = arith.constant 0 : index
    %c0_2 = arith.constant 0 : index
    %1 = vector.load %arg4[%c0_1, %c0_2] : memref<1x256xf32, #tpu.memory_space<vmem>>, vector<1x256xf32>
    %2 = vector.broadcast %1 : vector<1x256xf32> to vector<2x256xf32>
    %3 = arith.addf %0, %2 : vector<2x256xf32>
    %c2_i32 = arith.constant 2 : i32
    %4 = arith.muli %arg1, %c2_i32 : i32
    %c256_i32 = arith.constant 256 : i32
    %5 = arith.muli %arg0, %c256_i32 : i32
    %c0_3 = arith.constant 0 : index
    %6 = memref.load %arg2[%c0_3] : memref<1xi32, #tpu.memory_space<smem>>
    %7 = tpu.iota {dimensions = array<i32: 0>} : vector<2x1xi32>
    %8 = tpu.iota {dimensions = array<i32: 1>} : vector<1x256xi32>
    %9 = vector.broadcast %4 : i32 to vector<2x1xi32>
    %10 = arith.addi %9, %7 : vector<2x1xi32>
    %c256_i32_4 = arith.constant 256 : i32
    %11 = vector.broadcast %c256_i32_4 : i32 to vector<2x1xi32>
    %12 = arith.muli %10, %11 : vector<2x1xi32>
    %13 = vector.broadcast %5 : i32 to vector<2x1xi32>
    %14 = arith.addi %12, %13 : vector<2x1xi32>
    %c-1640531527_i32 = arith.constant -1640531527 : i32
    %15 = arith.muli %6, %c-1640531527_i32 : i32
    %16 = vector.broadcast %15 : i32 to vector<2x1xi32>
    %17 = arith.addi %14, %16 : vector<2x1xi32>
    %18 = vector.broadcast %17 : vector<2x1xi32> to vector<2x256xi32>
    %19 = vector.broadcast %8 : vector<1x256xi32> to vector<2x256xi32>
    %20 = arith.addi %18, %19 : vector<2x256xi32>
    %c-2048144789_i32 = arith.constant -2048144789 : i32
    %21 = vector.broadcast %c-2048144789_i32 : i32 to vector<2x256xi32>
    %22 = arith.muli %20, %21 : vector<2x256xi32>
    %c15_i32 = arith.constant 15 : i32
    %23 = vector.broadcast %c15_i32 : i32 to vector<2x256xi32>
    %24 = arith.shrui %22, %23 : vector<2x256xi32>
    %25 = arith.xori %22, %24 : vector<2x256xi32>
    %c-1028477387_i32 = arith.constant -1028477387 : i32
    %26 = vector.broadcast %c-1028477387_i32 : i32 to vector<2x256xi32>
    %27 = arith.muli %25, %26 : vector<2x256xi32>
    %c13_i32 = arith.constant 13 : i32
    %28 = vector.broadcast %c13_i32 : i32 to vector<2x256xi32>
    %29 = arith.shrui %27, %28 : vector<2x256xi32>
    %30 = arith.xori %27, %29 : vector<2x256xi32>
    %c429496730_i32 = arith.constant 429496730 : i32
    %31 = vector.broadcast %c429496730_i32 : i32 to vector<2x256xi32>
    %32 = arith.cmpi uge, %30, %31 : vector<2x256xi32>
    %cst = arith.constant 1.11111116 : f32
    %33 = vector.broadcast %cst : f32 to vector<2x256xf32>
    %34 = arith.mulf %3, %33 : vector<2x256xf32>
    %cst_5 = arith.constant 0.000000e+00 : f32
    %35 = vector.broadcast %cst_5 : f32 to vector<2x256xf32>
    %36 = arith.select %32, %34, %35 : vector<2x256xi1>, vector<2x256xf32>
    %c0_6 = arith.constant 0 : index
    %c0_7 = arith.constant 0 : index
    %37 = vector.load %arg5[%c0_6, %c0_7] : memref<2x256xf32, #tpu.memory_space<vmem>>, vector<2x256xf32>
    tpu.vector_store %arg5[%c0_6, %c0_7], %36 {strides = array<i32>} : memref<2x256xf32, #tpu.memory_space<vmem>>, vector<2x256xf32>,
    return
  }
  func.func @transform_0(%arg0: i32, %arg1: i32, %arg2: memref<1xi32, #tpu.memory_space<smem>>) -> (i32, i32) {
    %c0_i32 = arith.constant 0 : i32
    return %arg1, %arg0 : i32, i32
  }
  func.func @transform_1(%arg0: i32, %arg1: i32, %arg2: memref<1xi32, #tpu.memory_space<smem>>) -> (i32, i32) {
    %c0_i32 = arith.constant 0 : i32
    %c0_i32_0 = arith.constant 0 : i32
    return %c0_i32, %arg0 : i32, i32
  }
  func.func @transform_2(%arg0: i32, %arg1: i32, %arg2: memref<1xi32, #tpu.memory_space<smem>>) -> (i32, i32) {
    %c0_i32 = arith.constant 0 : i32
    return %arg1, %arg0 : i32, i32
  }
}

</mosaic_0001>

<llo_original>
// kernel: tpu_custom_call.1
$region0: #{tpu_custom_call.1}
  #allocation0 [shape = 'u32[]', space=smem, size = 0x4, offset = 0x4, fixed_abs, tag = 'smem constant byte address 0x4 - core index']
  #allocation1 [shape = 'u32[72,128]{1,0:T(1,128)}', space=vmem, size = 0x9000, scoped, tag = 'internal scratch']
  #allocation2 [shape = 's32[1]{0}', space=sflag, size = 0x4, scoped, tag = 'scoped memory for tpu_custom_call.1']
  #allocation3 [shape = 's32[1]{0:T(128)S(6)}', space=smem, size = 0x200, scoped, tag = 'prefetched SMEM operand 0']
  %s0 = inlined_call_operand.<no memory space> [shape: s32[1], index: 0, kind: input, shape index: {}]
  %s1 = inlined_call_operand.hbm [shape: f32[2,256], index: 1, kind: input, shape index: {}]
  %s2 = inlined_call_operand.vmem [shape: f32[1,256], index: 2, kind: input, shape index: {}]
  %s3 = inlined_call_operand.hbm [shape: f32[2,256], index: 3, kind: output, shape index: {}]
  %s4 = sld [smem:[#allocation0]]
  $region22: #{tpu_custom_call.1} parent=0
    _
  %s6 = ssub.s32 1, %s4
  %s7 = scalar_select 0, %s6, %s4
  %8 = sst [smem:[#allocation3]] %s0
  $region1: #{tpu_custom_call.1} parent=0
    #allocation4 [shape = 'u8[2048]{0}', space=vmem, size = 0x800, scoped, tag = 'input window, operand 1, single buffered']
    #allocation5 [shape = 's32[1]{0}', space=sflag, size = 0x4, scoped, tag = 'scoped memory for tpu_custom_call.1']
    #allocation6 [shape = 's32[1]{0}', space=sflag, size = 0x4, scoped, tag = 'scoped memory for tpu_custom_call.1']
    #allocation7 [shape = 'u8[2048]{0}', space=vmem, size = 0x800, scoped, tag = 'output window, operand 0, single buffered']
    %9 = vsyncpa [#allocation5], 0
    %10 = vsyncpa [#allocation6], 0
    // Predicated region
    $region2: #{tpu_custom_call.1} parent=1 // pred_check
      _
    $region3: #{tpu_custom_call.1} parent=1 // pred_check_branch
      %12 = sbr.rel (0) target = $region5
    $region4: #{tpu_custom_call.1} parent=1 // pred_region
      %14 = vsyncadd [#allocation5], 0
      %s16 = sshll.u32 %s1, 4
      %s17 = int_to_ptr.hbm [resolvable:$true] %s16
      %s18 = sshll.u32 [#allocation4], 4
      %s19 = int_to_ptr.vmem [resolvable:$true] %s18
      %21 = dma.hbm_to_vmem [thread:$0]  %s17, 64, %s19, [#allocation5]
    $region5: #{tpu_custom_call.1} parent=1 // pred_fallthru
      _
    // Predicated region
    $region6: #{tpu_custom_call.1} parent=1 // pred_check
      _
    $region7: #{tpu_custom_call.1} parent=1 // pred_check_branch
      %23 = sbr.rel (0) target = $region9
    $region8: #{tpu_custom_call.1} parent=1 // pred_region
      _
    $region9: #{tpu_custom_call.1} parent=1 // pred_fallthru
      _
    // Predicated region
    $region10: #{tpu_custom_call.1} parent=1 // pred_check
      _
    $region11: #{tpu_custom_call.1} parent=1 // pred_check_branch
      %25 = sbr.rel (0) target = $region13
    $region12: #{tpu_custom_call.1} parent=1 // pred_region
      %27 = dma.done [#allocation5], 64
    $region13: #{tpu_custom_call.1} parent=1 // pred_fallthru
      _
    %v28 = vld [vmem:[#allocation4] sm:$0xf]
    %v29 = vld [vmem:[%s2] sm:$0x3]
    %v31 = vperm.slane %v29, 0
    %v32 = vperm.slane %v29, 1
    %v33 = vrot.slane %v32, 6
    %vm34 = vcmask 1041408
    %v35 = vsel %vm34, %v31, %v33
    %v37 = vadd.f32 %v28, %v35
    %s38 = smul.u32 0, 2
    %s39 = smul.u32 0, 256
    %s40 = sld [smem:[#allocation3]]
    %v41 = vlaneseq
    %v42 = vshrl.u32 %v41, 7
    %v43 = vlaneseq
    %v44 = vand.u32 %v43, 127
    %v45 = vadd.s32 %v44, 128
    %v46 = vstv %s38
    %v47 = vadd.s32 %v46, %v42
    %v48 = vmul.u32 %v47, 256
    %v49 = vstv %s39
    %v50 = vadd.s32 %v48, %v49
    %s51 = smul.u32 %s40, 2654435769
    %v52 = vstv %s51
    %v53 = vadd.s32 %v50, %v52
    %v54 = vadd.s32 %v53, %v44
    %v55 = vadd.s32 %v53, %v45
    %v56 = vmul.u32 %v54, 2246822507
    %v57 = vmul.u32 %v55, 2246822507
    %v58 = vshrl.u32 %v56, 15
    %v59 = vshrl.u32 %v57, 15
    %v60 = vxor.u32 %v56, %v58
    %v61 = vxor.u32 %v57, %v59
    %v62 = vmul.u32 %v60, 3266489909
    %v63 = vmul.u32 %v61, 3266489909
    %v64 = vshrl.u32 %v62, 13
    %v65 = vshrl.u32 %v63, 13
    %v66 = vxor.u32 %v62, %v64
    %v67 = vxor.u32 %v63, %v65
    %v68 = vadd.s32 %v66, 2147483648
    %vm70 = vcmp.ge.s32.totalorder %v68, 2576980378
    %v71 = vadd.s32 %v67, 2147483648
    %vm73 = vcmp.ge.s32.totalorder %v71, 2576980378
    %v74 = vmul.f32 %v37, 1.1111112
    %76 = vst [vmem:[#allocation1] ss:$4 sm:$0xff] %v74
    %v77 = vld.sshfl [vmem:[#allocation1] sm:$0xff pattern:$0x73625140]
    %v78 = vld.sshfl [vmem:[#allocation1 + $0x8] sm:$0xff pattern:$0x73625140]
    %v81 = vsel %vm70, %v77, 0.0
    %v82 = vsel %vm73, %v78, 0.0
    %v85 = vrot.slane %v82, 6
    %v86 = vsel %vm34, %v81, %v85
    %88 = vst [vmem:[#allocation7] sm:$0xf] %v86
    // Predicated region
    $region14: #{tpu_custom_call.1} parent=1 // pred_check
      _
    $region15: #{tpu_custom_call.1} parent=1 // pred_check_branch
      %90 = sbr.rel (0) target = $region17
    $region16: #{tpu_custom_call.1} parent=1 // pred_region
      %92 = vsyncadd [#allocation6], 0
      %s94 = sshll.u32 [#allocation7], 4
      %s95 = int_to_ptr.vmem [resolvable:$true] %s94
      %s96 = sshll.u32 %s3, 4
      %s97 = int_to_ptr.hbm [resolvable:$true] %s96
      %99 = dma.vmem_to_hbm [thread:$0]  %s95, 64, %s97, [#allocation6]
    $region17: #{tpu_custom_call.1} parent=1 // pred_fallthru
      _
    // Predicated region
    $region18: #{tpu_custom_call.1} parent=1 // pred_check
      _
    $region19: #{tpu_custom_call.1} parent=1 // pred_check_branch
      %101 = sbr.rel (0) target = $region21
    $region20: #{tpu_custom_call.1} parent=1 // pred_region
      %103 = dma.done [#allocation6], 64
    $region21: #{tpu_custom_call.1} parent=1 // pred_fallthru
      _
    %104 = vsyncpa [#allocation5], 1
    %105 = vsyncpa [#allocation6], 1

</llo_original>
